<compile_context>
chip_gen: v5e
topology: v5e:2x2
jax: 0.10.0
libtpu: 0.0.40
codegen_flags: <defaults>
</compile_context>

<pallas_src>
import functools

import jax
import jax.numpy as jnp
from jax.experimental import pallas as pl
from jax.experimental.pallas import tpu as pltpu


_LANE = 128


def _round_up(x, m):
    return (x + m - 1) // m * m


def _cdiv(a, b):
    return (a + b - 1) // b


def _sublane(dtype):
    return {4: 8, 2: 16, 1: 32}.get(jnp.dtype(dtype).itemsize, 8)


def _tpu_budget():
    """Returns (max_token_tile, vmem_cap_bytes) for the local TPU generation."""
    kind = ""
    try:
        kind = jax.devices()[0].device_kind.lower()
    except Exception:
        pass
    if "v5" in kind or "v6" in kind:
        # 128 MiB VMEM: bigger token tiles, generous scoped limit.
        return 512, 100 * 1024 * 1024
    # v7x (64 MiB VMEM) or unknown: stay conservative.
    return 256, 56 * 1024 * 1024


def _mlp_kernel(x_ref, w1_ref, b1_ref, w2_ref, b2_ref, o_ref):
    # x_ref:  (TM, IN_P)      bf16 token tile
    # w1_ref: (IN_P, HID_P)   bf16 fc1 weight (transposed), VMEM-resident
    # b1_ref: (1, HID_P)      f32
    # w2_ref: (HID_P, OUT_P)  bf16 fc2 weight (transposed), VMEM-resident
    # b2_ref: (1, OUT_P)      f32
    # o_ref:  (TM, OUT_P)     output dtype = input dtype

    # fc1: bf16 operands straight to the MXU, f32 accumulation.
    h = jnp.dot(x_ref[...], w1_ref[...], preferred_element_type=jnp.float32)
    h = h + b1_ref[...]

    # Exact (erf-based) GELU, matching torch.nn.GELU() default.
    h = 0.5 * h * (1.0 + jax.lax.erf(h * jnp.float32(0.7071067811865476)))

    # dropout p=0 -> identity (drop1)

    # fc2: downcast the activated intermediate to the weight dtype for the MXU.
    o = jnp.dot(h.astype(w2_ref.dtype), w2_ref[...],
                preferred_element_type=jnp.float32)
    o = o + b2_ref[...]

    # dropout p=0 -> identity (drop2)
    o_ref[...] = o.astype(o_ref.dtype)


def prepare_mlp_params(w1, b1, w2, b2, *, param_dtype=jnp.bfloat16):
    """Pre-materialize transposed / 128-padded / bf16 weights once (static weights).

    w1: (HID, IN), b1: (HID,), w2: (OUT, HID), b2: (OUT,)  (PyTorch layout).
    """
    HID, IN = w1.shape
    OUT, HID2 = w2.shape
    assert HID2 == HID, "fc2 in_features must equal fc1 out_features"
    IN_P, HID_P, OUT_P = (_round_up(d, _LANE) for d in (IN, HID, OUT))

    # Zero padding is numerically exact: padded hidden units get bias 0 ->
    # GELU(0)=0 -> multiplied by zero rows of fc2.
    w1_t = jnp.pad(w1.T, ((0, IN_P - IN), (0, HID_P - HID))).astype(param_dtype)
    w2_t = jnp.pad(w2.T, ((0, HID_P - HID), (0, OUT_P - OUT))).astype(param_dtype)
    b1_2d = jnp.pad(b1.astype(jnp.float32), (0, HID_P - HID)).reshape(1, HID_P)
    b2_2d = jnp.pad(b2.astype(jnp.float32), (0, OUT_P - OUT)).reshape(1, OUT_P)

    return {"w1_t": w1_t, "b1": b1_2d, "w2_t": w2_t, "b2": b2_2d,
            "in_features": IN, "hidden_features": HID, "out_features": OUT}


@functools.partial(
    jax.jit,
    static_argnames=("tm", "out_features", "vmem_limit",
                     "single_buffer_weights", "compute_dtype"))
def _mlp_forward_impl(x, w1_t, b1, w2_t, b2, *, tm, out_features, vmem_limit,
                      single_buffer_weights, compute_dtype):
    B, S, IN = x.shape
    IN_P, HID_P = w1_t.shape
    OUT_P = w2_t.shape[1]
    tokens = B * S
    TOK_P = _round_up(tokens, tm)

    # Token-major 2-D slab, bf16 for the MXU, lane-padded features.
    x2d = x.reshape(tokens, IN).astype(compute_dtype)
    x2d = jnp.pad(x2d, ((0, TOK_P - tokens), (0, IN_P - IN)))

    # Resident (constant index map) operands: single-buffer them when supported.
    wkw = {"pipeline_mode": pl.Buffered(1)} if single_buffer_weights else {}

    out2d = pl.pallas_call(
        _mlp_kernel,
        out_shape=jax.ShapeDtypeStruct((TOK_P, OUT_P), x.dtype),
        grid_spec=pltpu.PrefetchScalarGridSpec(
            num_scalar_prefetch=0,
            grid=(TOK_P // tm,),
            in_specs=[
                pl.BlockSpec((tm, IN_P), lambda i: (i, 0)),            # x tile
                pl.BlockSpec((IN_P, HID_P), lambda i: (0, 0), **wkw),  # fc1 W
                pl.BlockSpec((1, HID_P), lambda i: (0, 0), **wkw),     # fc1 b
                pl.BlockSpec((HID_P, OUT_P), lambda i: (0, 0), **wkw), # fc2 W
                pl.BlockSpec((1, OUT_P), lambda i: (0, 0), **wkw),     # fc2 b
            ],
            out_specs=pl.BlockSpec((tm, OUT_P), lambda i: (i, 0)),
        ),
        compiler_params=pltpu.CompilerParams(
            dimension_semantics=("parallel",),
            vmem_limit_bytes=vmem_limit,
        ),
    )(x2d, w1_t, b1, w2_t, b2)

    return out2d[:tokens, :out_features].reshape(B, S, out_features)


_BUFFERED_WEIGHTS_OK = True  # flipped off if this JAX build rejects pl.Buffered(1)


def mlp_forward(x, params, *, tile_m=None):
    """x: (B, S, in_features); params: output of prepare_mlp_params."""
    global _BUFFERED_WEIGHTS_OK

    B, S, IN = x.shape
    assert IN == params["in_features"]
    OUT = params["out_features"]
    IN_P, HID_P = params["w1_t"].shape
    OUT_P = params["w2_t"].shape[1]
    tokens = B * S
    compute_dtype = jnp.bfloat16

    max_tm, vmem_cap = _tpu_budget()
    if tile_m is not None:
        max_tm = tile_m

    # Token tile: multiple of the sublane packing of both the bf16 compute
    # slab and the output dtype; capped so tiny inputs aren't over-padded.
    sub = max(_sublane(compute_dtype), _sublane(x.dtype))
    tm = _round_up(min(max_tm, _round_up(tokens, sub)), sub)

    # Keep at least 2 grid steps so both TensorCores (v7x megacore) get work.
    if _round_up(tokens, tm) // tm < 2:
        tm_half = _round_up(_cdiv(tokens, 2), sub)
        tm = max(sub, min(tm, tm_half))

    # Derive the VMEM working set; shrink the tile if it would blow the cap.
    w_itemsize = jnp.dtype(params["w1_t"].dtype).itemsize
    w_bufs = 1 if _BUFFERED_WEIGHTS_OK else 2

    def footprint(tm_):
        x_tiles = 2 * tm_ * IN_P * jnp.dtype(compute_dtype).itemsize
        out_tiles = 2 * tm_ * OUT_P * jnp.dtype(x.dtype).itemsize
        weights = w_bufs * (IN_P * HID_P + HID_P * OUT_P) * w_itemsize
        biases = 2 * (HID_P + OUT_P) * 4
        hidden = tm_ * HID_P * 4  # f32 fc1+GELU intermediate
        return x_tiles + out_tiles + weights + biases + hidden

    while tm > sub and footprint(tm) > vmem_cap:
        tm = max(sub, _round_up(tm // 2, sub))
    # TODO(synk): if HID is so large that the resident bf16 weights alone exceed
    # the VMEM cap, stream HID on a second "arbitrary" grid axis with an f32
    # accumulator instead of keeping the full weights resident.

    vmem_limit = int(min(vmem_cap,
                         max(32 * 1024 * 1024, footprint(tm) + 8 * 1024 * 1024)))

    kwargs = dict(tm=tm, out_features=OUT, vmem_limit=vmem_limit,
                  compute_dtype=compute_dtype)
    args = (x, params["w1_t"], params["b1"], params["w2_t"], params["b2"])

    if _BUFFERED_WEIGHTS_OK:
        try:
            return _mlp_forward_impl(*args, single_buffer_weights=True, **kwargs)
        except Exception:
            # pl.Buffered(1) unsupported on this build: fall back permanently.
            _BUFFERED_WEIGHTS_OK = False
    return _mlp_forward_impl(*args, single_buffer_weights=False, **kwargs)


if __name__ == "__main__":
    # Small shapes consistent with the module: (batch, seq, in_features)
    B, S = 2, 8
    IN_FEATURES, HIDDEN_FEATURES, OUT_FEATURES = 32, 64, 32

    key = jax.random.PRNGKey(0)
    kx, k1w, k1b, k2w, k2b = jax.random.split(key, 5)

    # nn.Linear-style init: U(-1/sqrt(fan_in), +1/sqrt(fan_in))
    bound1 = 1.0 / float(jnp.sqrt(jnp.float32(IN_FEATURES)))
    w1 = jax.random.uniform(k1w, (HIDDEN_FEATURES, IN_FEATURES), jnp.float32,
                            -bound1, bound1)
    b1 = jax.random.uniform(k1b, (HIDDEN_FEATURES,), jnp.float32, -bound1, bound1)
    bound2 = 1.0 / float(jnp.sqrt(jnp.float32(HIDDEN_FEATURES)))
    w2 = jax.random.uniform(k2w, (OUT_FEATURES, HIDDEN_FEATURES), jnp.float32,
                            -bound2, bound2)
    b2 = jax.random.uniform(k2b, (OUT_FEATURES,), jnp.float32, -bound2, bound2)

    x = jax.random.normal(kx, (B, S, IN_FEATURES), jnp.float32)

    # Parameter prep (transpose / pad / bf16 cast) happens ONCE here, not per call.
    params = prepare_mlp_params(w1, b1, w2, b2)

    y = jax.block_until_ready(mlp_forward(x, params))

    # Pure-JAX reference emulating the kernel's bf16 MXU operands with f32
    # accumulation (erf GELU, dropout p=0 -> identity).
    def _bf(a):
        return a.astype(jnp.bfloat16).astype(jnp.float32)

    h_ref = _bf(x) @ _bf(w1).T + b1
    h_ref = 0.5 * h_ref * (1.0 + jax.lax.erf(h_ref / jnp.sqrt(2.0)))
    y_ref = _bf(h_ref) @ _bf(w2).T + b2

    assert y.shape == (B, S, OUT_FEATURES)
    assert y.dtype == x.dtype
    max_err = float(jnp.max(jnp.abs(y - y_ref)))
    assert jnp.allclose(y, y_ref, atol=1e-2, rtol=1e-2), \
        f"mismatch vs reference (max abs err {max_err})"

    print("KERNEL_OK")
</pallas_src>

<mosaic_0001>
module attributes {stable_mosaic.version = 11 : i64} {
  func.func @_mlp_kernel(%arg0: i32, %arg1: memref<16x128xbf16, #tpu.memory_space<vmem>>, %arg2: memref<128x128xbf16, #tpu.memory_space<vmem>>, %arg3: memref<1x128xf32, #tpu.memory_space<vmem>>, %arg4: memref<128x128xbf16, #tpu.memory_space<vmem>>, %arg5: memref<1x128xf32, #tpu.memory_space<vmem>>, %arg6: memref<16x128xf32, #tpu.memory_space<vmem>>) attributes {dimension_semantics = [#tpu.dimension_semantics<parallel>], iteration_bounds = array<i64: 1>, scalar_prefetch = 0 : i64, scratch_operands = 0 : i64, tpu.core_type = #tpu.core_type<tc>, window_params = [{transform_indices = @transform_0, window_bounds = array<i64: 16, 128>}, {pipeline_mode = #tpu.pipeline_mode<synchronous>, transform_indices = @transform_1, window_bounds = array<i64: 128, 128>}, {pipeline_mode = #tpu.pipeline_mode<synchronous>, transform_indices = @transform_2, window_bounds = array<i64: 1, 128>}, {pipeline_mode = #tpu.pipeline_mode<synchronous>, transform_indices = @transform_3, window_bounds = array<i64: 128, 128>}, {pipeline_mode = #tpu.pipeline_mode<synchronous>, transform_indices = @transform_4, window_bounds = array<i64: 1, 128>}, {transform_indices = @transform_5, window_bounds = array<i64: 16, 128>}]} {
    %c0 = arith.constant 0 : index
    %c0_0 = arith.constant 0 : index
    %0 = vector.load %arg1[%c0, %c0_0] : memref<16x128xbf16, #tpu.memory_space<vmem>>, vector<16x128xbf16>
    %c0_1 = arith.constant 0 : index
    %c0_2 = arith.constant 0 : index
    %1 = vector.load %arg2[%c0_1, %c0_2] : memref<128x128xbf16, #tpu.memory_space<vmem>>, vector<128x128xbf16>
    %cst = arith.constant dense<0.000000e+00> : vector<16x128xf32>
    %2 = tpu.matmul %0, %1, %cst {dimension_numbers = #tpu.dot_dimension_numbers<[1], [0], [0], [1], [0, 0, 1, 1], [], []>} : vector<16x128xbf16>, vector<128x128xbf16>, vector<16x128xf32> -> vector<16x128xf32>
    %c0_3 = arith.constant 0 : index
    %c0_4 = arith.constant 0 : index
    %3 = vector.load %arg3[%c0_3, %c0_4] : memref<1x128xf32, #tpu.memory_space<vmem>>, vector<1x128xf32>
    %4 = vector.broadcast %3 : vector<1x128xf32> to vector<16x128xf32>
    %5 = arith.addf %2, %4 : vector<16x128xf32>
    %cst_5 = arith.constant 5.000000e-01 : f32
    %6 = vector.broadcast %cst_5 : f32 to vector<16x128xf32>
    %7 = arith.mulf %6, %5 : vector<16x128xf32>
    %cst_6 = arith.constant 0.707106769 : f32
    %8 = vector.broadcast %cst_6 : f32 to vector<16x128xf32>
    %9 = arith.mulf %5, %8 : vector<16x128xf32>
    %10 = math.erf %9 : vector<16x128xf32>
    %cst_7 = arith.constant 1.000000e+00 : f32
    %11 = vector.broadcast %cst_7 : f32 to vector<16x128xf32>
    %12 = arith.addf %11, %10 : vector<16x128xf32>
    %13 = arith.mulf %7, %12 : vector<16x128xf32>
    %14 = arith.truncf %13 : vector<16x128xf32> to vector<16x128xbf16>
    %c0_8 = arith.constant 0 : index
    %c0_9 = arith.constant 0 : index
    %15 = vector.load %arg4[%c0_8, %c0_9] : memref<128x128xbf16, #tpu.memory_space<vmem>>, vector<128x128xbf16>
    %cst_10 = arith.constant dense<0.000000e+00> : vector<16x128xf32>
    %16 = tpu.matmul %14, %15, %cst_10 {dimension_numbers = #tpu.dot_dimension_numbers<[1], [0], [0], [1], [0, 0, 1, 1], [], []>} : vector<16x128xbf16>, vector<128x128xbf16>, vector<16x128xf32> -> vector<16x128xf32>
    %c0_11 = arith.constant 0 : index
    %c0_12 = arith.constant 0 : index
    %17 = vector.load %arg5[%c0_11, %c0_12] : memref<1x128xf32, #tpu.memory_space<vmem>>, vector<1x128xf32>
    %18 = vector.broadcast %17 : vector<1x128xf32> to vector<16x128xf32>
    %19 = arith.addf %16, %18 : vector<16x128xf32>
    %c0_13 = arith.constant 0 : index
    %c0_14 = arith.constant 0 : index
    %20 = vector.load %arg6[%c0_13, %c0_14] : memref<16x128xf32, #tpu.memory_space<vmem>>, vector<16x128xf32>
    tpu.vector_store %arg6[%c0_13, %c0_14], %19 {strides = array<i32>} : memref<16x128xf32, #tpu.memory_space<vmem>>, vector<16x128xf32>,
    return
  }
  func.func @transform_0(%arg0: i32) -> (i32, i32) {
    %c0_i32 = arith.constant 0 : i32
    %c0_i32_0 = arith.constant 0 : i32
    return %arg0, %c0_i32 : i32, i32
  }
  func.func @transform_1(%arg0: i32) -> (i32, i32) {
    %c0_i32 = arith.constant 0 : i32
    %c0_i32_0 = arith.constant 0 : i32
    %c0_i32_1 = arith.constant 0 : i32
    return %c0_i32, %c0_i32_0 : i32, i32
  }
  func.func @transform_2(%arg0: i32) -> (i32, i32) {
    %c0_i32 = arith.constant 0 : i32
    %c0_i32_0 = arith.constant 0 : i32
    %c0_i32_1 = arith.constant 0 : i32
    return %c0_i32, %c0_i32_0 : i32, i32
  }
  func.func @transform_3(%arg0: i32) -> (i32, i32) {
    %c0_i32 = arith.constant 0 : i32
    %c0_i32_0 = arith.constant 0 : i32
    %c0_i32_1 = arith.constant 0 : i32
    return %c0_i32, %c0_i32_0 : i32, i32
  }
  func.func @transform_4(%arg0: i32) -> (i32, i32) {
    %c0_i32 = arith.constant 0 : i32
    %c0_i32_0 = arith.constant 0 : i32
    %c0_i32_1 = arith.constant 0 : i32
    return %c0_i32, %c0_i32_0 : i32, i32
  }
  func.func @transform_5(%arg0: i32) -> (i32, i32) {
    %c0_i32 = arith.constant 0 : i32
    %c0_i32_0 = arith.constant 0 : i32
    return %arg0, %c0_i32 : i32, i32
  }
}

module attributes {stable_mosaic.version = 11 : i64} {
  func.func @_mlp_kernel(%arg0: i32, %arg1: memref<16x128xbf16, #tpu.memory_space<vmem>>, %arg2: memref<128x128xbf16, #tpu.memory_space<vmem>>, %arg3: memref<1x128xf32, #tpu.memory_space<vmem>>, %arg4: memref<128x128xbf16, #tpu.memory_space<vmem>>, %arg5: memref<1x128xf32, #tpu.memory_space<vmem>>, %arg6: memref<16x128xf32, #tpu.memory_space<vmem>>) attributes {dimension_semantics = [#tpu.dimension_semantics<parallel>], iteration_bounds = array<i64: 1>, scalar_prefetch = 0 : i64, scratch_operands = 0 : i64, tpu.core_type = #tpu.core_type<tc>, window_params = [{transform_indices = @transform_0, window_bounds = array<i64: 16, 128>}, {pipeline_mode = #tpu.pipeline_mode<synchronous>, transform_indices = @transform_1, window_bounds = array<i64: 128, 128>}, {pipeline_mode = #tpu.pipeline_mode<synchronous>, transform_indices = @transform_2, window_bounds = array<i64: 1, 128>}, {pipeline_mode = #tpu.pipeline_mode<synchronous>, transform_indices = @transform_3, window_bounds = array<i64: 128, 128>}, {pipeline_mode = #tpu.pipeline_mode<synchronous>, transform_indices = @transform_4, window_bounds = array<i64: 1, 128>}, {transform_indices = @transform_5, window_bounds = array<i64: 16, 128>}]} {
    %c0 = arith.constant 0 : index
    %c0_0 = arith.constant 0 : index
    %0 = vector.load %arg1[%c0, %c0_0] : memref<16x128xbf16, #tpu.memory_space<vmem>>, vector<16x128xbf16>
    %c0_1 = arith.constant 0 : index
    %c0_2 = arith.constant 0 : index
    %1 = vector.load %arg2[%c0_1, %c0_2] : memref<128x128xbf16, #tpu.memory_space<vmem>>, vector<128x128xbf16>
    %cst = arith.constant dense<0.000000e+00> : vector<16x128xf32>
    %2 = tpu.matmul %0, %1, %cst {dimension_numbers = #tpu.dot_dimension_numbers<[1], [0], [0], [1], [0, 0, 1, 1], [], []>} : vector<16x128xbf16>, vector<128x128xbf16>, vector<16x128xf32> -> vector<16x128xf32>
    %c0_3 = arith.constant 0 : index
    %c0_4 = arith.constant 0 : index
    %3 = vector.load %arg3[%c0_3, %c0_4] : memref<1x128xf32, #tpu.memory_space<vmem>>, vector<1x128xf32>
    %4 = vector.broadcast %3 : vector<1x128xf32> to vector<16x128xf32>
    %5 = arith.addf %2, %4 : vector<16x128xf32>
    %cst_5 = arith.constant 5.000000e-01 : f32
    %6 = vector.broadcast %cst_5 : f32 to vector<16x128xf32>
    %7 = arith.mulf %6, %5 : vector<16x128xf32>
    %cst_6 = arith.constant 0.707106769 : f32
    %8 = vector.broadcast %cst_6 : f32 to vector<16x128xf32>
    %9 = arith.mulf %5, %8 : vector<16x128xf32>
    %10 = math.erf %9 : vector<16x128xf32>
    %cst_7 = arith.constant 1.000000e+00 : f32
    %11 = vector.broadcast %cst_7 : f32 to vector<16x128xf32>
    %12 = arith.addf %11, %10 : vector<16x128xf32>
    %13 = arith.mulf %7, %12 : vector<16x128xf32>
    %14 = arith.truncf %13 : vector<16x128xf32> to vector<16x128xbf16>
    %c0_8 = arith.constant 0 : index
    %c0_9 = arith.constant 0 : index
    %15 = vector.load %arg4[%c0_8, %c0_9] : memref<128x128xbf16, #tpu.memory_space<vmem>>, vector<128x128xbf16>
    %cst_10 = arith.constant dense<0.000000e+00> : vector<16x128xf32>
    %16 = tpu.matmul %14, %15, %cst_10 {dimension_numbers = #tpu.dot_dimension_numbers<[1], [0], [0], [1], [0, 0, 1, 1], [], []>} : vector<16x128xbf16>, vector<128x128xbf16>, vector<16x128xf32> -> vector<16x128xf32>
    %c0_11 = arith.constant 0 : index
    %c0_12 = arith.constant 0 : index
    %17 = vector.load %arg5[%c0_11, %c0_12] : memref<1x128xf32, #tpu.memory_space<vmem>>, vector<1x128xf32>
    %18 = vector.broadcast %17 : vector<1x128xf32> to vector<16x128xf32>
    %19 = arith.addf %16, %18 : vector<16x128xf32>
    %c0_13 = arith.constant 0 : index
    %c0_14 = arith.constant 0 : index
    %20 = vector.load %arg6[%c0_13, %c0_14] : memref<16x128xf32, #tpu.memory_space<vmem>>, vector<16x128xf32>
    tpu.vector_store %arg6[%c0_13, %c0_14], %19 {strides = array<i32>} : memref<16x128xf32, #tpu.memory_space<vmem>>, vector<16x128xf32>,
    return
  }
  func.func @transform_0(%arg0: i32) -> (i32, i32) {
    %c0_i32 = arith.constant 0 : i32
    %c0_i32_0 = arith.constant 0 : i32
    return %arg0, %c0_i32 : i32, i32
  }
  func.func @transform_1(%arg0: i32) -> (i32, i32) {
    %c0_i32 = arith.constant 0 : i32
    %c0_i32_0 = arith.constant 0 : i32
    %c0_i32_1 = arith.constant 0 : i32
    return %c0_i32, %c0_i32_0 : i32, i32
  }
  func.func @transform_2(%arg0: i32) -> (i32, i32) {
    %c0_i32 = arith.constant 0 : i32
    %c0_i32_0 = arith.constant 0 : i32
    %c0_i32_1 = arith.constant 0 : i32
    return %c0_i32, %c0_i32_0 : i32, i32
  }
  func.func @transform_3(%arg0: i32) -> (i32, i32) {
    %c0_i32 = arith.constant 0 : i32
    %c0_i32_0 = arith.constant 0 : i32
    %c0_i32_1 = arith.constant 0 : i32
    return %c0_i32, %c0_i32_0 : i32, i32
  }
  func.func @transform_4(%arg0: i32) -> (i32, i32) {
    %c0_i32 = arith.constant 0 : i32
    %c0_i32_0 = arith.constant 0 : i32
    %c0_i32_1 = arith.constant 0 : i32
    return %c0_i32, %c0_i32_0 : i32, i32
  }
  func.func @transform_5(%arg0: i32) -> (i32, i32) {
    %c0_i32 = arith.constant 0 : i32
    %c0_i32_0 = arith.constant 0 : i32
    return %arg0, %c0_i32 : i32, i32
  }
}

</mosaic_0001>

<llo_original>
// kernel: _mlp_forward_impl.1
$region0: #{_mlp_forward_impl.1}
  #allocation0 [shape = 'u32[]', space=smem, size = 0x4, offset = 0x4, fixed_abs, tag = 'smem constant byte address 0x4 - core index']
  #allocation1 [shape = 'u32[72,128]{1,0:T(1,128)}', space=vmem, size = 0x9000, scoped, tag = 'internal scratch']
  %s0 = inlined_call_operand.vmem [shape: bf16[16,128], index: 0, kind: input, shape index: {}]
  %s1 = inlined_call_operand.hbm [shape: bf16[128,128], index: 1, kind: input, shape index: {}]
  %s2 = inlined_call_operand.vmem [shape: f32[1,128], index: 2, kind: input, shape index: {}]
  %s3 = inlined_call_operand.hbm [shape: bf16[128,128], index: 3, kind: input, shape index: {}]
  %s4 = inlined_call_operand.vmem [shape: f32[1,128], index: 4, kind: input, shape index: {}]
  %s5 = inlined_call_operand.vmem [shape: f32[16,128], index: 5, kind: output, shape index: {}]
  %s6 = sld [smem:[#allocation0]]
  $region38: #{_mlp_forward_impl.1} parent=0
    _
  %s8 = ssub.s32 1, %s6
  %s9 = scalar_select 0, %s8, %s6
  $region1: #{_mlp_forward_impl.1} parent=0
    #allocation2 [shape = 'u8[32768]{0}', space=vmem, size = 0x8000, scoped, tag = 'input window, operand 1, single buffered']
    #allocation3 [shape = 's32[1]{0}', space=sflag, size = 0x4, scoped, tag = 'scoped memory for _mlp_forward_impl.1']
    #allocation4 [shape = 'u8[32768]{0}', space=vmem, size = 0x8000, scoped, tag = 'input window, operand 3, single buffered']
    #allocation5 [shape = 's32[1]{0}', space=sflag, size = 0x4, scoped, tag = 'scoped memory for _mlp_forward_impl.1']
    %10 = vsyncpa [#allocation3], 0
    %11 = vsyncpa [#allocation5], 0
    // Predicated region
    $region2: #{_mlp_forward_impl.1} parent=1 // pred_check
      _
    $region3: #{_mlp_forward_impl.1} parent=1 // pred_check_branch
      %13 = sbr.rel (0) target = $region5
    $region4: #{_mlp_forward_impl.1} parent=1 // pred_region
      _
    $region5: #{_mlp_forward_impl.1} parent=1 // pred_fallthru
      _
    // Predicated region
    $region6: #{_mlp_forward_impl.1} parent=1 // pred_check
      _
    $region7: #{_mlp_forward_impl.1} parent=1 // pred_check_branch
      %15 = sbr.rel (0) target = $region9
    $region8: #{_mlp_forward_impl.1} parent=1 // pred_region
      %17 = vsyncadd [#allocation3], 0
      %s18 = sshll.u32 %s1, 4
      %s19 = int_to_ptr.hbm [resolvable:$true] %s18
      %s20 = sshll.u32 [#allocation2], 4
      %s21 = int_to_ptr.vmem [resolvable:$true] %s20
      %26 = dma.hbm_to_vmem [thread:$0]  %s19, 1024, %s21, [#allocation3], 64, 64, 4
    $region9: #{_mlp_forward_impl.1} parent=1 // pred_fallthru
      _
    // Predicated region
    $region10: #{_mlp_forward_impl.1} parent=1 // pred_check
      _
    $region11: #{_mlp_forward_impl.1} parent=1 // pred_check_branch
      %28 = sbr.rel (0) target = $region13
    $region12: #{_mlp_forward_impl.1} parent=1 // pred_region
      _
    $region13: #{_mlp_forward_impl.1} parent=1 // pred_fallthru
      _
    // Predicated region
    $region14: #{_mlp_forward_impl.1} parent=1 // pred_check
      _
    $region15: #{_mlp_forward_impl.1} parent=1 // pred_check_branch
      %30 = sbr.rel (0) target = $region17
    $region16: #{_mlp_forward_impl.1} parent=1 // pred_region
      %32 = vsyncadd [#allocation5], 0
      %s33 = sshll.u32 %s3, 4
      %s34 = int_to_ptr.hbm [resolvable:$true] %s33
      %s35 = sshll.u32 [#allocation4], 4
      %s36 = int_to_ptr.vmem [resolvable:$true] %s35
      %41 = dma.hbm_to_vmem [thread:$0]  %s34, 1024, %s36, [#allocation5], 64, 64, 4
    $region17: #{_mlp_forward_impl.1} parent=1 // pred_fallthru
      _
    // Predicated region
    $region18: #{_mlp_forward_impl.1} parent=1 // pred_check
      _
    $region19: #{_mlp_forward_impl.1} parent=1 // pred_check_branch
      %43 = sbr.rel (0) target = $region21
    $region20: #{_mlp_forward_impl.1} parent=1 // pred_region
      _
    $region21: #{_mlp_forward_impl.1} parent=1 // pred_fallthru
      _
    // Predicated region
    $region22: #{_mlp_forward_impl.1} parent=1 // pred_check
      _
    $region23: #{_mlp_forward_impl.1} parent=1 // pred_check_branch
      %45 = sbr.rel (0) target = $region25
    $region24: #{_mlp_forward_impl.1} parent=1 // pred_region
      %47 = dma.done [#allocation3], 1024
    $region25: #{_mlp_forward_impl.1} parent=1 // pred_fallthru
      _
    // Predicated region
    $region26: #{_mlp_forward_impl.1} parent=1 // pred_check
      _
    $region27: #{_mlp_forward_impl.1} parent=1 // pred_check_branch
      %49 = sbr.rel (0) target = $region29
    $region28: #{_mlp_forward_impl.1} parent=1 // pred_region
      %51 = dma.done [#allocation5], 1024
    $region29: #{_mlp_forward_impl.1} parent=1 // pred_fallthru
      _
    %v52 = vld [vmem:[%s0] sm:$0xf]
    %v53 = vld [vmem:[%s0 + $0x4] sm:$0xf]
    %v54 = vld [vmem:[#allocation2] sm:$0xf]
    %v55 = vld [vmem:[#allocation2 + $0x4] sm:$0xf]
    %v56 = vld [vmem:[#allocation2 + $0x8] sm:$0xf]
    %v57 = vld [vmem:[#allocation2 + $0xc] sm:$0xf]
    %v58 = vld [vmem:[#allocation2 + $0x10] sm:$0xf]
    %v59 = vld [vmem:[#allocation2 + $0x14] sm:$0xf]
    %v60 = vld [vmem:[#allocation2 + $0x18] sm:$0xf]
    %v61 = vld [vmem:[#allocation2 + $0x1c] sm:$0xf]
    %v62 = vld [vmem:[#allocation2 + $0x20] sm:$0xf]
    %v63 = vld [vmem:[#allocation2 + $0x24] sm:$0xf]
    %v64 = vld [vmem:[#allocation2 + $0x28] sm:$0xf]
    %v65 = vld [vmem:[#allocation2 + $0x2c] sm:$0xf]
    %v66 = vld [vmem:[#allocation2 + $0x30] sm:$0xf]
    %v67 = vld [vmem:[#allocation2 + $0x34] sm:$0xf]
    %v68 = vld [vmem:[#allocation2 + $0x38] sm:$0xf]
    %v69 = vld [vmem:[#allocation2 + $0x3c] sm:$0xf]
    %v70 = vld [vmem:[%s2] sm:$0x1]
    %v72 = vperm.slane %v70, 0
    %v76 = vunpack.c.l.b16 %v52
    %v77 = vunpack.c.l.b16 %v53
    %v78 = vpack.c.b16 %v77, %v76
    %v96 = vunpack.c.l.b16 %v54
    %v97 = vunpack.c.l.b16 %v55
    %v98 = vunpack.c.l.b16 %v56
    %v99 = vunpack.c.l.b16 %v57
    %v100 = vunpack.c.l.b16 %v58
    %v101 = vunpack.c.l.b16 %v59
    %v102 = vunpack.c.l.b16 %v60
    %v103 = vunpack.c.l.b16 %v61
    %v104 = vunpack.c.l.b16 %v62
    %v105 = vunpack.c.l.b16 %v63
    %v106 = vunpack.c.l.b16 %v64
    %v107 = vunpack.c.l.b16 %v65
    %v108 = vunpack.c.l.b16 %v66
    %v109 = vunpack.c.l.b16 %v67
    %v110 = vunpack.c.l.b16 %v68
    %v111 = vunpack.c.l.b16 %v69
    %v112 = vpack.c.b16 %v97, %v96
    %v113 = vpack.c.b16 %v99, %v98
    %v114 = vpack.c.b16 %v101, %v100
    %v115 = vpack.c.b16 %v103, %v102
    %v116 = vpack.c.b16 %v105, %v104
    %v117 = vpack.c.b16 %v107, %v106
    %v118 = vpack.c.b16 %v109, %v108
    %v119 = vpack.c.b16 %v111, %v110
    %128 = vmatpush.bf16.msra.mxu0 %v119
    %129 = vmatpush.bf16.msra.mxu0 %v118
    %130 = vmatpush.bf16.msra.mxu0 %v117
    %131 = vmatpush.bf16.msra.mxu0 %v116
    %132 = vmatpush.bf16.msra.mxu0 %v115
    %133 = vmatpush.bf16.msra.mxu0 %v114
    %134 = vmatpush.bf16.msra.mxu0 %v113
    %135 = vmatpush.bf16.msra.mxu0 %v112
    %136 = vmatmul.bf16.gmra.mxu0 %v78
    %v137 = vpop.f32.mrf.mxu0
    %v138 = vadd.f32 %v72, %v137
    %v139 = vpop.f32.mrf.mxu0
    %v140 = vadd.f32 %v72, %v139
    %141 = vdwg.mxu0
    %v142 = vmul.f32 %v138, 0.5
    %v143 = vmul.f32 %v140, 0.5
    %v144 = vmul.f32 %v138, 0.70710677
    %v145 = vmul.f32 %v140, 0.70710677
    %v146 = vmul.f32 %v144, %v144
    %v147 = vmin.f32 16.0, %v146
    %v148 = vmul.f32 %v147, 2.1237322e-06
    %v149 = vadd.f32 %v148, 0.00028619796
    %v150 = vmul.f32 %v147, %v149
    %v151 = vadd.f32 %v150, 0.0036580483
    %v152 = vmul.f32 %v147, %v151
    %v153 = vadd.f32 %v152, 0.05243302
    %v154 = vmul.f32 %v147, %v153
    %v155 = vadd.f32 %v154, 0.18741608
    %v156 = vmul.f32 %v147, %v155
    %v157 = vadd.f32 %v156, 1.1283791
    %v158 = vmul.f32 %v144, %v157
    %v159 = vmul.f32 %v147, 3.8918573e-05
    %v160 = vadd.f32 %v159, 0.001143296
    %v161 = vmul.f32 %v147, %v160
    %v162 = vadd.f32 %v161, 0.014752088
    %v163 = vmul.f32 %v147, %v162
    %v164 = vadd.f32 %v163, 0.112945676
    %v165 = vmul.f32 %v147, %v164
    %v166 = vadd.f32 %v165, 0.4994258
    %v167 = vmul.f32 %v147, %v166
    %v168 = vadd.f32 %v167, 1.0
    %v169 = vrcp.pop %v168
    %v170 = vmul.f32 %v168, %v169
    %v171 = vsub.f32 1.0, %v170
    %v172 = vmul.f32 %v169, %v171
    %v173 = vadd.f32 %v169, %v172
    %vm174 = vweird.f32 %v168
    %vm175 = vweird.f32 %v169
    %vm176 = vmor %vm174, %vm175
    %v177 = vsel %vm176, %v169, %v173
    %v178 = vand.u32 2147483647, %v168
    %vm179 = vcmp.eq.f32.partialorder %v178, 8.507059e+37
    %v180 = vand.u32 %v168, 2147483648
    %v181 = vor.u32 1.1754944e-38, %v180
    %v182 = vsel %vm179, %v181, %v177
    %v183 = vmul.f32 %v158, %v182
    %v184 = vmin.f32 %v183, 1.0
    %v185 = vmax.f32 %v184, -1.0
    %v186 = vmul.f32 %v145, %v145
    %v187 = vmin.f32 16.0, %v186
    %v188 = vmul.f32 %v187, 2.1237322e-06
    %v189 = vadd.f32 %v188, 0.00028619796
    %v190 = vmul.f32 %v187, %v189
    %v191 = vadd.f32 %v190, 0.0036580483
    %v192 = vmul.f32 %v187, %v191
    %v193 = vadd.f32 %v192, 0.05243302
    %v194 = vmul.f32 %v187, %v193
    %v195 = vadd.f32 %v194, 0.18741608
    %v196 = vmul.f32 %v187, %v195
    %v197 = vadd.f32 %v196, 1.1283791
    %v198 = vmul.f32 %v145, %v197
    %v199 = vmul.f32 %v187, 3.8918573e-05
    %v200 = vadd.f32 %v199, 0.001143296
    %v201 = vmul.f32 %v187, %v200
    %v202 = vadd.f32 %v201, 0.014752088
    %v203 = vmul.f32 %v187, %v202
    %v204 = vadd.f32 %v203, 0.112945676
    %v205 = vmul.f32 %v187, %v204
    %v206 = vadd.f32 %v205, 0.4994258
    %v207 = vmul.f32 %v187, %v206
    %v208 = vadd.f32 %v207, 1.0
    %v209 = vrcp.pop %v208
    %v210 = vmul.f32 %v208, %v209
    %v211 = vsub.f32 1.0, %v210
    %v212 = vmul.f32 %v209, %v211
    %v213 = vadd.f32 %v209, %v212
    %vm214 = vweird.f32 %v208
    %vm215 = vweird.f32 %v209
    %vm216 = vmor %vm214, %vm215
    %v217 = vsel %vm216, %v209, %v213
    %v218 = vand.u32 2147483647, %v208
    %vm219 = vcmp.eq.f32.partialorder %v218, 8.507059e+37
    %v220 = vand.u32 %v208, 2147483648
    %v221 = vor.u32 1.1754944e-38, %v220
    %v222 = vsel %vm219, %v221, %v217
    %v223 = vmul.f32 %v198, %v222
    %v224 = vmin.f32 %v223, 1.0
    %v225 = vmax.f32 %v224, -1.0
    %v226 = vadd.f32 %v185, 1.0
    %v227 = vadd.f32 %v225, 1.0
    %v228 = vmul.f32 %v142, %v226
    %v229 = vmul.f32 %v143, %v227
    %v230 = vpack.c.bf16 %v229, %v228
    %v231 = vld [vmem:[#allocation4] sm:$0xf]
    %v232 = vld [vmem:[#allocation4 + $0x4] sm:$0xf]
    %v233 = vld [vmem:[#allocation4 + $0x8] sm:$0xf]
    %v234 = vld [vmem:[#allocation4 + $0xc] sm:$0xf]
    %v235 = vld [vmem:[#allocation4 + $0x10] sm:$0xf]
    %v236 = vld [vmem:[#allocation4 + $0x14] sm:$0xf]
    %v237 = vld [vmem:[#allocation4 + $0x18] sm:$0xf]
    %v238 = vld [vmem:[#allocation4 + $0x1c] sm:$0xf]
    %v239 = vld [vmem:[#allocation4 + $0x20] sm:$0xf]
    %v240 = vld [vmem:[#allocation4 + $0x24] sm:$0xf]
    %v241 = vld [vmem:[#allocation4 + $0x28] sm:$0xf]
    %v242 = vld [vmem:[#allocation4 + $0x2c] sm:$0xf]
    %v243 = vld [vmem:[#allocation4 + $0x30] sm:$0xf]
    %v244 = vld [vmem:[#allocation4 + $0x34] sm:$0xf]
    %v245 = vld [vmem:[#allocation4 + $0x38] sm:$0xf]
    %v246 = vld [vmem:[#allocation4 + $0x3c] sm:$0xf]
    %v247 = vld [vmem:[%s4] sm:$0x1]
    %v249 = vperm.slane %v247, 0
    %v267 = vunpack.c.l.b16 %v231
    %v268 = vunpack.c.l.b16 %v232
    %v269 = vunpack.c.l.b16 %v233
    %v270 = vunpack.c.l.b16 %v234
    %v271 = vunpack.c.l.b16 %v235
    %v272 = vunpack.c.l.b16 %v236
    %v273 = vunpack.c.l.b16 %v237
    %v274 = vunpack.c.l.b16 %v238
    %v275 = vunpack.c.l.b16 %v239
    %v276 = vunpack.c.l.b16 %v240
    %v277 = vunpack.c.l.b16 %v241
    %v278 = vunpack.c.l.b16 %v242
    %v279 = vunpack.c.l.b16 %v243
    %v280 = vunpack.c.l.b16 %v244
    %v281 = vunpack.c.l.b16 %v245
    %v282 = vunpack.c.l.b16 %v246
    %v283 = vpack.c.b16 %v268, %v267
    %v284 = vpack.c.b16 %v270, %v269
    %v285 = vpack.c.b16 %v272, %v271
    %v286 = vpack.c.b16 %v274, %v273
    %v287 = vpack.c.b16 %v276, %v275
    %v288 = vpack.c.b16 %v278, %v277
    %v289 = vpack.c.b16 %v280, %v279
    %v290 = vpack.c.b16 %v282, %v281
    %299 = vmatpush.bf16.msra.mxu0 %v290
    %300 = vmatpush.bf16.msra.mxu0 %v289
    %301 = vmatpush.bf16.msra.mxu0 %v288
    %302 = vmatpush.bf16.msra.mxu0 %v287
    %303 = vmatpush.bf16.msra.mxu0 %v286
    %304 = vmatpush.bf16.msra.mxu0 %v285
    %305 = vmatpush.bf16.msra.mxu0 %v284
    %306 = vmatpush.bf16.msra.mxu0 %v283
    %307 = vmatmul.bf16.gmra.mxu0 %v230
    %v308 = vpop.f32.mrf.mxu0
    %v309 = vadd.f32 %v249, %v308
    %v310 = vpop.f32.mrf.mxu0
    %v311 = vadd.f32 %v249, %v310
    %312 = vdwg.mxu0
    %313 = vst [vmem:[%s5] sm:$0xff] %v309
    %314 = vst [vmem:[%s5 + $0x8] sm:$0xff] %v311
    // Predicated region
    $region30: #{_mlp_forward_impl.1} parent=1 // pred_check
      _
    $region31: #{_mlp_forward_impl.1} parent=1 // pred_check_branch
      %316 = sbr.rel (0) target = $region33
    $region32: #{_mlp_forward_impl.1} parent=1 // pred_region
      _
    $region33: #{_mlp_forward_impl.1} parent=1 // pred_fallthru
      _
    // Predicated region
    $region34: #{_mlp_forward_impl.1} parent=1 // pred_check
      _
    $region35: #{_mlp_forward_impl.1} parent=1 // pred_check_branch
      %318 = sbr.rel (0) target = $region37
    $region36: #{_mlp_forward_impl.1} parent=1 // pred_region
      _
    $region37: #{_mlp_forward_impl.1} parent=1 // pred_fallthru
      _
    %319 = vsyncpa [#allocation3], 1
    %320 = vsyncpa [#allocation5], 1

// kernel: _mlp_forward_impl.1
$region0: #{_mlp_forward_impl.1}
  #allocation0 [shape = 'u32[]', space=smem, size = 0x4, offset = 0x4, fixed_abs, tag = 'smem constant byte address 0x4 - core index']
  #allocation1 [shape = 'u32[72,128]{1,0:T(1,128)}', space=vmem, size = 0x9000, scoped, tag = 'internal scratch']
  %s0 = inlined_call_operand.vmem [shape: bf16[16,128], index: 0, kind: input, shape index: {}]
  %s1 = inlined_call_operand.hbm [shape: bf16[128,128], index: 1, kind: input, shape index: {}]
  %s2 = inlined_call_operand.vmem [shape: f32[1,128], index: 2, kind: input, shape index: {}]
  %s3 = inlined_call_operand.hbm [shape: bf16[128,128], index: 3, kind: input, shape index: {}]
  %s4 = inlined_call_operand.vmem [shape: f32[1,128], index: 4, kind: input, shape index: {}]
  %s5 = inlined_call_operand.vmem [shape: f32[16,128], index: 5, kind: output, shape index: {}]
  %s6 = sld [smem:[#allocation0]]
  $region38: #{_mlp_forward_impl.1} parent=0
    _
  %s8 = ssub.s32 1, %s6
  %s9 = scalar_select 0, %s8, %s6
  $region1: #{_mlp_forward_impl.1} parent=0
    #allocation2 [shape = 'u8[32768]{0}', space=vmem, size = 0x8000, scoped, tag = 'input window, operand 1, single buffered']
    #allocation3 [shape = 's32[1]{0}', space=sflag, size = 0x4, scoped, tag = 'scoped memory for _mlp_forward_impl.1']
    #allocation4 [shape = 'u8[32768]{0}', space=vmem, size = 0x8000, scoped, tag = 'input window, operand 3, single buffered']
    #allocation5 [shape = 's32[1]{0}', space=sflag, size = 0x4, scoped, tag = 'scoped memory for _mlp_forward_impl.1']
    %10 = vsyncpa [#allocation3], 0
    %11 = vsyncpa [#allocation5], 0
    // Predicated region
    $region2: #{_mlp_forward_impl.1} parent=1 // pred_check
      _
    $region3: #{_mlp_forward_impl.1} parent=1 // pred_check_branch
      %13 = sbr.rel (0) target = $region5
    $region4: #{_mlp_forward_impl.1} parent=1 // pred_region
      _
    $region5: #{_mlp_forward_impl.1} parent=1 // pred_fallthru
      _
    // Predicated region
    $region6: #{_mlp_forward_impl.1} parent=1 // pred_check
      _
    $region7: #{_mlp_forward_impl.1} parent=1 // pred_check_branch
      %15 = sbr.rel (0) target = $region9
    $region8: #{_mlp_forward_impl.1} parent=1 // pred_region
      %17 = vsyncadd [#allocation3], 0
      %s18 = sshll.u32 %s1, 4
      %s19 = int_to_ptr.hbm [resolvable:$true] %s18
      %s20 = sshll.u32 [#allocation2], 4
      %s21 = int_to_ptr.vmem [resolvable:$true] %s20
      %26 = dma.hbm_to_vmem [thread:$0]  %s19, 1024, %s21, [#allocation3], 64, 64, 4
    $region9: #{_mlp_forward_impl.1} parent=1 // pred_fallthru
      _
    // Predicated region
    $region10: #{_mlp_forward_impl.1} parent=1 // pred_check
      _
    $region11: #{_mlp_forward_impl.1} parent=1 // pred_check_branch
      %28 = sbr.rel (0) target = $region13
    $region12: #{_mlp_forward_impl.1} parent=1 // pred_region
      _
    $region13: #{_mlp_forward_impl.1} parent=1 // pred_fallthru
      _
    // Predicated region
    $region14: #{_mlp_forward_impl.1} parent=1 // pred_check
      _
    $region15: #{_mlp_forward_impl.1} parent=1 // pred_check_branch
      %30 = sbr.rel (0) target = $region17
    $region16: #{_mlp_forward_impl.1} parent=1 // pred_region
      %32 = vsyncadd [#allocation5], 0
      %s33 = sshll.u32 %s3, 4
      %s34 = int_to_ptr.hbm [resolvable:$true] %s33
      %s35 = sshll.u32 [#allocation4], 4
      %s36 = int_to_ptr.vmem [resolvable:$true] %s35
      %41 = dma.hbm_to_vmem [thread:$0]  %s34, 1024, %s36, [#allocation5], 64, 64, 4
    $region17: #{_mlp_forward_impl.1} parent=1 // pred_fallthru
      _
    // Predicated region
    $region18: #{_mlp_forward_impl.1} parent=1 // pred_check
      _
    $region19: #{_mlp_forward_impl.1} parent=1 // pred_check_branch
      %43 = sbr.rel (0) target = $region21
    $region20: #{_mlp_forward_impl.1} parent=1 // pred_region
      _
    $region21: #{_mlp_forward_impl.1} parent=1 // pred_fallthru
      _
    // Predicated region
    $region22: #{_mlp_forward_impl.1} parent=1 // pred_check
      _
    $region23: #{_mlp_forward_impl.1} parent=1 // pred_check_branch
      %45 = sbr.rel (0) target = $region25
    $region24: #{_mlp_forward_impl.1} parent=1 // pred_region
      %47 = dma.done [#allocation3], 1024
    $region25: #{_mlp_forward_impl.1} parent=1 // pred_fallthru
      _
    // Predicated region
    $region26: #{_mlp_forward_impl.1} parent=1 // pred_check
      _
    $region27: #{_mlp_forward_impl.1} parent=1 // pred_check_branch
      %49 = sbr.rel (0) target = $region29
    $region28: #{_mlp_forward_impl.1} parent=1 // pred_region
      %51 = dma.done [#allocation5], 1024
    $region29: #{_mlp_forward_impl.1} parent=1 // pred_fallthru
      _
    %v52 = vld [vmem:[%s0] sm:$0xf]
    %v53 = vld [vmem:[%s0 + $0x4] sm:$0xf]
    %v54 = vld [vmem:[#allocation2] sm:$0xf]
    %v55 = vld [vmem:[#allocation2 + $0x4] sm:$0xf]
    %v56 = vld [vmem:[#allocation2 + $0x8] sm:$0xf]
    %v57 = vld [vmem:[#allocation2 + $0xc] sm:$0xf]
    %v58 = vld [vmem:[#allocation2 + $0x10] sm:$0xf]
    %v59 = vld [vmem:[#allocation2 + $0x14] sm:$0xf]
    %v60 = vld [vmem:[#allocation2 + $0x18] sm:$0xf]
    %v61 = vld [vmem:[#allocation2 + $0x1c] sm:$0xf]
    %v62 = vld [vmem:[#allocation2 + $0x20] sm:$0xf]
    %v63 = vld [vmem:[#allocation2 + $0x24] sm:$0xf]
    %v64 = vld [vmem:[#allocation2 + $0x28] sm:$0xf]
    %v65 = vld [vmem:[#allocation2 + $0x2c] sm:$0xf]
    %v66 = vld [vmem:[#allocation2 + $0x30] sm:$0xf]
    %v67 = vld [vmem:[#allocation2 + $0x34] sm:$0xf]
    %v68 = vld [vmem:[#allocation2 + $0x38] sm:$0xf]
    %v69 = vld [vmem:[#allocation2 + $0x3c] sm:$0xf]
    %v70 = vld [vmem:[%s2] sm:$0x1]
    %v72 = vperm.slane %v70, 0
    %v76 = vunpack.c.l.b16 %v52
    %v77 = vunpack.c.l.b16 %v53
    %v78 = vpack.c.b16 %v77, %v76
    %v96 = vunpack.c.l.b16 %v54
    %v97 = vunpack.c.l.b16 %v55
    %v98 = vunpack.c.l.b16 %v56
    %v99 = vunpack.c.l.b16 %v57
    %v100 = vunpack.c.l.b16 %v58
    %v101 = vunpack.c.l.b16 %v59
    %v102 = vunpack.c.l.b16 %v60
    %v103 = vunpack.c.l.b16 %v61
    %v104 = vunpack.c.l.b16 %v62
    %v105 = vunpack.c.l.b16 %v63
    %v106 = vunpack.c.l.b16 %v64
    %v107 = vunpack.c.l.b16 %v65
    %v108 = vunpack.c.l.b16 %v66
    %v109 = vunpack.c.l.b16 %v67
    %v110 = vunpack.c.l.b16 %v68
    %v111 = vunpack.c.l.b16 %v69
    %v112 = vpack.c.b16 %v97, %v96
    %v113 = vpack.c.b16 %v99, %v98
    %v114 = vpack.c.b16 %v101, %v100
    %v115 = vpack.c.b16 %v103, %v102
    %v116 = vpack.c.b16 %v105, %v104
    %v117 = vpack.c.b16 %v107, %v106
    %v118 = vpack.c.b16 %v109, %v108
    %v119 = vpack.c.b16 %v111, %v110
    %128 = vmatpush.bf16.msra.mxu0 %v119
    %129 = vmatpush.bf16.msra.mxu0 %v118
    %130 = vmatpush.bf16.msra.mxu0 %v117
    %131 = vmatpush.bf16.msra.mxu0 %v116
    %132 = vmatpush.bf16.msra.mxu0 %v115
    %133 = vmatpush.bf16.msra.mxu0 %v114
    %134 = vmatpush.bf16.msra.mxu0 %v113
    %135 = vmatpush.bf16.msra.mxu0 %v112
    %136 = vmatmul.bf16.gmra.mxu0 %v78
    %v137 = vpop.f32.mrf.mxu0
    %v138 = vadd.f32 %v72, %v137
    %v139 = vpop.f32.mrf.mxu0
    %v140 = vadd.f32 %v72, %v139
    %141 = vdwg.mxu0
    %v142 = vmul.f32 %v138, 0.5
    %v143 = vmul.f32 %v140, 0.5
    %v144 = vmul.f32 %v138, 0.70710677
    %v145 = vmul.f32 %v140, 0.70710677
    %v146 = vmul.f32 %v144, %v144
    %v147 = vmin.f32 16.0, %v146
    %v148 = vmul.f32 %v147, 2.1237322e-06
    %v149 = vadd.f32 %v148, 0.00028619796
    %v150 = vmul.f32 %v147, %v149
    %v151 = vadd.f32 %v150, 0.0036580483
    %v152 = vmul.f32 %v147, %v151
    %v153 = vadd.f32 %v152, 0.05243302
    %v154 = vmul.f32 %v147, %v153
    %v155 = vadd.f32 %v154, 0.18741608
    %v156 = vmul.f32 %v147, %v155
    %v157 = vadd.f32 %v156, 1.1283791
    %v158 = vmul.f32 %v144, %v157
    %v159 = vmul.f32 %v147, 3.8918573e-05
    %v160 = vadd.f32 %v159, 0.001143296
    %v161 = vmul.f32 %v147, %v160
    %v162 = vadd.f32 %v161, 0.014752088
    %v163 = vmul.f32 %v147, %v162
    %v164 = vadd.f32 %v163, 0.112945676
    %v165 = vmul.f32 %v147, %v164
    %v166 = vadd.f32 %v165, 0.4994258
    %v167 = vmul.f32 %v147, %v166
    %v168 = vadd.f32 %v167, 1.0
    %v169 = vrcp.pop %v168
    %v170 = vmul.f32 %v168, %v169
    %v171 = vsub.f32 1.0, %v170
    %v172 = vmul.f32 %v169, %v171
    %v173 = vadd.f32 %v169, %v172
    %vm174 = vweird.f32 %v168
    %vm175 = vweird.f32 %v169
    %vm176 = vmor %vm174, %vm175
    %v177 = vsel %vm176, %v169, %v173
    %v178 = vand.u32 2147483647, %v168
    %vm179 = vcmp.eq.f32.partialorder %v178, 8.507059e+37
    %v180 = vand.u32 %v168, 2147483648
    %v181 = vor.u32 1.1754944e-38, %v180
    %v182 = vsel %vm179, %v181, %v177
    %v183 = vmul.f32 %v158, %v182
    %v184 = vmin.f32 %v183, 1.0
    %v185 = vmax.f32 %v184, -1.0
    %v186 = vmul.f32 %v145, %v145
    %v187 = vmin.f32 16.0, %v186
    %v188 = vmul.f32 %v187, 2.1237322e-06
    %v189 = vadd.f32 %v188, 0.00028619796
    %v190 = vmul.f32 %v187, %v189
    %v191 = vadd.f32 %v190, 0.0036580483
    %v192 = vmul.f32 %v187, %v191
    %v193 = vadd.f32 %v192, 0.05243302
    %v194 = vmul.f32 %v187, %v193
    %v195 = vadd.f32 %v194, 0.18741608
    %v196 = vmul.f32 %v187, %v195
    %v197 = vadd.f32 %v196, 1.1283791
    %v198 = vmul.f32 %v145, %v197
    %v199 = vmul.f32 %v187, 3.8918573e-05
    %v200 = vadd.f32 %v199, 0.001143296
    %v201 = vmul.f32 %v187, %v200
    %v202 = vadd.f32 %v201, 0.014752088
    %v203 = vmul.f32 %v187, %v202
    %v204 = vadd.f32 %v203, 0.112945676
    %v205 = vmul.f32 %v187, %v204
    %v206 = vadd.f32 %v205, 0.4994258
    %v207 = vmul.f32 %v187, %v206
    %v208 = vadd.f32 %v207, 1.0
    %v209 = vrcp.pop %v208
    %v210 = vmul.f32 %v208, %v209
    %v211 = vsub.f32 1.0, %v210
    %v212 = vmul.f32 %v209, %v211
    %v213 = vadd.f32 %v209, %v212
    %vm214 = vweird.f32 %v208
    %vm215 = vweird.f32 %v209
    %vm216 = vmor %vm214, %vm215
    %v217 = vsel %vm216, %v209, %v213
    %v218 = vand.u32 2147483647, %v208
    %vm219 = vcmp.eq.f32.partialorder %v218, 8.507059e+37
    %v220 = vand.u32 %v208, 2147483648
    %v221 = vor.u32 1.1754944e-38, %v220
    %v222 = vsel %vm219, %v221, %v217
    %v223 = vmul.f32 %v198, %v222
    %v224 = vmin.f32 %v223, 1.0
    %v225 = vmax.f32 %v224, -1.0
    %v226 = vadd.f32 %v185, 1.0
    %v227 = vadd.f32 %v225, 1.0
    %v228 = vmul.f32 %v142, %v226
    %v229 = vmul.f32 %v143, %v227
    %v230 = vpack.c.bf16 %v229, %v228
    %v231 = vld [vmem:[#allocation4] sm:$0xf]
    %v232 = vld [vmem:[#allocation4 + $0x4] sm:$0xf]
    %v233 = vld [vmem:[#allocation4 + $0x8] sm:$0xf]
    %v234 = vld [vmem:[#allocation4 + $0xc] sm:$0xf]
    %v235 = vld [vmem:[#allocation4 + $0x10] sm:$0xf]
    %v236 = vld [vmem:[#allocation4 + $0x14] sm:$0xf]
    %v237 = vld [vmem:[#allocation4 + $0x18] sm:$0xf]
    %v238 = vld [vmem:[#allocation4 + $0x1c] sm:$0xf]
    %v239 = vld [vmem:[#allocation4 + $0x20] sm:$0xf]
    %v240 = vld [vmem:[#allocation4 + $0x24] sm:$0xf]
    %v241 = vld [vmem:[#allocation4 + $0x28] sm:$0xf]
    %v242 = vld [vmem:[#allocation4 + $0x2c] sm:$0xf]
    %v243 = vld [vmem:[#allocation4 + $0x30] sm:$0xf]
    %v244 = vld [vmem:[#allocation4 + $0x34] sm:$0xf]
    %v245 = vld [vmem:[#allocation4 + $0x38] sm:$0xf]
    %v246 = vld [vmem:[#allocation4 + $0x3c] sm:$0xf]
    %v247 = vld [vmem:[%s4] sm:$0x1]
    %v249 = vperm.slane %v247, 0
    %v267 = vunpack.c.l.b16 %v231
    %v268 = vunpack.c.l.b16 %v232
    %v269 = vunpack.c.l.b16 %v233
    %v270 = vunpack.c.l.b16 %v234
    %v271 = vunpack.c.l.b16 %v235
    %v272 = vunpack.c.l.b16 %v236
    %v273 = vunpack.c.l.b16 %v237
    %v274 = vunpack.c.l.b16 %v238
    %v275 = vunpack.c.l.b16 %v239
    %v276 = vunpack.c.l.b16 %v240
    %v277 = vunpack.c.l.b16 %v241
    %v278 = vunpack.c.l.b16 %v242
    %v279 = vunpack.c.l.b16 %v243
    %v280 = vunpack.c.l.b16 %v244
    %v281 = vunpack.c.l.b16 %v245
    %v282 = vunpack.c.l.b16 %v246
    %v283 = vpack.c.b16 %v268, %v267
    %v284 = vpack.c.b16 %v270, %v269
    %v285 = vpack.c.b16 %v272, %v271
    %v286 = vpack.c.b16 %v274, %v273
    %v287 = vpack.c.b16 %v276, %v275
    %v288 = vpack.c.b16 %v278, %v277
    %v289 = vpack.c.b16 %v280, %v279
    %v290 = vpack.c.b16 %v282, %v281
    %299 = vmatpush.bf16.msra.mxu0 %v290
    %300 = vmatpush.bf16.msra.mxu0 %v289
    %301 = vmatpush.bf16.msra.mxu0 %v288
    %302 = vmatpush.bf16.msra.mxu0 %v287
    %303 = vmatpush.bf16.msra.mxu0 %v286
    %304 = vmatpush.bf16.msra.mxu0 %v285
    %305 = vmatpush.bf16.msra.mxu0 %v284
    %306 = vmatpush.bf16.msra.mxu0 %v283
    %307 = vmatmul.bf16.gmra.mxu0 %v230
    %v308 = vpop.f32.mrf.mxu0
    %v309 = vadd.f32 %v249, %v308
    %v310 = vpop.f32.mrf.mxu0
    %v311 = vadd.f32 %v249, %v310
    %312 = vdwg.mxu0
    %313 = vst [vmem:[%s5] sm:$0xff] %v309
    %314 = vst [vmem:[%s5 + $0x8] sm:$0xff] %v311
    // Predicated region
    $region30: #{_mlp_forward_impl.1} parent=1 // pred_check
      _
    $region31: #{_mlp_forward_impl.1} parent=1 // pred_check_branch
      %316 = sbr.rel (0) target = $region33
    $region32: #{_mlp_forward_impl.1} parent=1 // pred_region
      _
    $region33: #{_mlp_forward_impl.1} parent=1 // pred_fallthru
      _
    // Predicated region
    $region34: #{_mlp_forward_impl.1} parent=1 // pred_check
      _
    $region35: #{_mlp_forward_impl.1} parent=1 // pred_check_branch
      %318 = sbr.rel (0) target = $region37
    $region36: #{_mlp_forward_impl.1} parent=1 // pred_region
      _
    $region37: #{_mlp_forward_impl.1} parent=1 // pred_fallthru
      _
    %319 = vsyncpa [#allocation3], 1
    %320 = vsyncpa [#allocation5], 1

</llo_original>
